<compile_context>
chip_gen: v5e
topology: v5e:2x2
jax: 0.10.0
libtpu: 0.0.40
codegen_flags: <defaults>
</compile_context>

<pallas_src>
import jax
import jax.numpy as jnp
from jax.experimental import pallas as pl
from jax.experimental.pallas import tpu as pltpu


def _round_up(x, m):
    return (x + m - 1) // m * m


def skip_then_add_kernel(x_ref, wt_ref, b_ref, r_ref, o_ref, acc_ref):
    """Accumulates one (tm, tn) tile of  x @ Wt  over the K grid axis, then
    adds bias + residual and stores on the last K step.

    x_ref  : (tm, tk)  bf16 matmul operand tile
    wt_ref : (tk, tn)  bf16 weight tile, (in, out) layout
    b_ref  : (1, tn)   f32 bias tile           (fetched once per (i,j))
    r_ref  : (tm, tn)  residual (original x)   (fetched once per (i,j))
    o_ref  : (tm, tn)  output tile
    acc_ref: (tm, tn)  f32 VMEM accumulator scratch
    """
    k = pl.program_id(2)

    @pl.when(k == 0)
    def _():
        acc_ref[...] = jnp.zeros_like(acc_ref)

    acc_ref[...] += jnp.dot(x_ref[...], wt_ref[...],
                            preferred_element_type=jnp.float32)

    @pl.when(k == pl.num_programs(2) - 1)
    def _():
        o_ref[...] = (acc_ref[...] + b_ref[...]
                      + r_ref[...].astype(jnp.float32)).astype(o_ref.dtype)


def skip_then_add(x, wt, bias, *, compute_dtype=jnp.bfloat16,
                  tm_target=512, tn_target=512, tk_target=512):
    """Fused  (x @ wt) + bias + x .

    x    : (M, H) activations (f32 or bf16), hidden on the lane (fast) axis.
    wt   : (H, H) weight ALREADY transposed to (in, out) layout.
    bias : (H,)   bias.
    """
    M, H = x.shape
    assert wt.shape == (H, H), "square Linear(H, H) expected"
    out_dtype = x.dtype

    # ---- pad H to a multiple of 128 (lane-dense tiles, MXU width) -----------
    # NOTE: in production the weight/bias pads (and the bf16 cast below) should
    # be hoisted to parameter-prep time; they are per-call here only for
    # self-containedness and are no-ops when H % 128 == 0.
    H_pad = _round_up(H, 128)
    if H_pad != H:
        wt = jnp.pad(wt, ((0, H_pad - H), (0, H_pad - H)))
        bias = jnp.pad(bias, (0, H_pad - H))
        x = jnp.pad(x, ((0, 0), (0, H_pad - H)))

    # ---- row tiling (M axis) -------------------------------------------------
    tm = min(tm_target, _round_up(M, 8))
    M_pad = _round_up(M, tm)
    if M_pad != M:
        x = jnp.pad(x, ((0, M_pad - M), (0, 0)))

    # ---- N / K tiling: multiples of 128 that divide H_pad --------------------
    def pick_tile(target):
        t = min(target, H_pad)
        t = max(128, t - (t % 128))
        while H_pad % t != 0:
            t -= 128
        return t

    tn = pick_tile(tn_target)
    tk = pick_tile(tk_target)
    m_tiles, n_tiles, k_tiles = M_pad // tm, H_pad // tn, H_pad // tk

    # Cast matmul operands once (bf16 MXU stream); residual keeps x's dtype.
    x_mm = x if x.dtype == compute_dtype else x.astype(compute_dtype)
    wt_c = wt if wt.dtype == compute_dtype else wt.astype(compute_dtype)
    b2 = bias.reshape(1, H_pad).astype(jnp.float32)

    # ---- explicit scoped-VMEM budget (double-buffered inputs/output + acc) ---
    cbytes = jnp.dtype(compute_dtype).itemsize
    vmem_needed = (
        2 * tm * tk * cbytes                         # x tile
        + 2 * tk * tn * cbytes                       # weight tile
        + 2 * tm * tn * x.dtype.itemsize             # residual tile
        + 2 * tn * 4                                 # bias tile
        + 2 * tm * tn * jnp.dtype(out_dtype).itemsize  # output tile
        + tm * tn * 4                                # f32 accumulator scratch
    )
    vmem_limit = int(min(max(2 * vmem_needed, 32 * 1024 * 1024),
                         48 * 1024 * 1024))

    out = pl.pallas_call(
        skip_then_add_kernel,
        out_shape=jax.ShapeDtypeStruct((M_pad, H_pad), out_dtype),
        grid_spec=pltpu.PrefetchScalarGridSpec(
            num_scalar_prefetch=0,
            # Reduction axis last: output / bias / residual block indices are
            # constant over it, so they are DMA'd once per (i, j) tile.
            grid=(m_tiles, n_tiles, k_tiles),
            in_specs=[
                pl.BlockSpec((tm, tk), lambda i, j, k: (i, k)),  # x (bf16)
                pl.BlockSpec((tk, tn), lambda i, j, k: (k, j)),  # weight
                pl.BlockSpec((1, tn), lambda i, j, k: (0, j)),   # bias
                pl.BlockSpec((tm, tn), lambda i, j, k: (i, j)),  # residual x
            ],
            out_specs=pl.BlockSpec((tm, tn), lambda i, j, k: (i, j)),
            scratch_shapes=[pltpu.VMEM((tm, tn), jnp.float32)],
        ),
        compiler_params=pltpu.CompilerParams(
            dimension_semantics=("parallel", "parallel", "arbitrary"),
            vmem_limit_bytes=vmem_limit,
        ),
    )(x_mm, wt_c, b2, x)

    if M_pad != M or H_pad != H:
        out = out[:M, :H]
    return out


class SkipThenAddPallas:
    """Mirrors SkipThenAdd with a list of Linear(H, H) layers.

    Master parameters are kept in f32 (for the reference); the transposed,
    bf16-cast weight of the *last* module is precomputed once at init so the
    hot path does no per-call transpose or cast.
    """

    def __init__(self, hidden, n_modules=2, key=None, compute_dtype=jnp.bfloat16):
        key = jax.random.PRNGKey(0) if key is None else key
        self.compute_dtype = compute_dtype
        self.params = []
        bound = 1.0 / jnp.sqrt(hidden)
        for i in range(n_modules):
            kw, kb, key = jax.random.split(jax.random.fold_in(key, i), 3)
            w = jax.random.uniform(kw, (hidden, hidden), jnp.float32, -bound, bound)
            b = jax.random.uniform(kb, (hidden,), jnp.float32, -bound, bound)
            self.params.append((w, b))
        # Only the last module's output survives the PyTorch loop.
        w_last, b_last = self.params[-1]
        self.wt_last = jnp.asarray(w_last.T, dtype=compute_dtype)  # (in, out)
        self.b_last = jnp.asarray(b_last, dtype=jnp.float32)

    def __call__(self, x):
        lead = x.shape[:-1]
        H = x.shape[-1]
        x2d = x.reshape(-1, H)
        out = skip_then_add(x2d, self.wt_last, self.b_last,
                            compute_dtype=self.compute_dtype)
        return out.reshape(*lead, H)


def _reference(x, params):
    """Pure-JAX f32 replica of the PyTorch forward (for the sanity check)."""
    out = None
    for w, b in params:
        y = x @ w.T + b
        out = y + x
    return out


if __name__ == "__main__":
    B, S, H = 2, 8, 32          # small demo shapes (hidden on the lane axis)
    key = jax.random.PRNGKey(0)
    kx, kp = jax.random.split(key)

    x = jax.random.normal(kx, (B, S, H), dtype=jnp.float32)

    block = SkipThenAddPallas(H, n_modules=2, key=kp)

    out = block(x)
    out = jax.block_until_ready(out)

    ref = _reference(x.reshape(B * S, H), block.params).reshape(B, S, H)
    # bf16 weights/activations in the MXU (f32 accumulation) => looser tolerance.
    assert out.shape == ref.shape and out.dtype == x.dtype
    assert jnp.allclose(out, ref, atol=3e-2, rtol=3e-2), "mismatch vs reference"

    print("KERNEL_OK")
</pallas_src>

<mosaic_0001>
module attributes {stable_mosaic.version = 11 : i64} {
  func.func @skip_then_add_kernel(%arg0: i32, %arg1: i32, %arg2: i32, %arg3: memref<16x128xbf16, #tpu.memory_space<vmem>>, %arg4: memref<128x128xbf16, #tpu.memory_space<vmem>>, %arg5: memref<1x128xf32, #tpu.memory_space<vmem>>, %arg6: memref<16x128xf32, #tpu.memory_space<vmem>>, %arg7: memref<16x128xf32, #tpu.memory_space<vmem>>, %arg8: memref<16x128xf32, #tpu.memory_space<vmem>>) attributes {dimension_semantics = [#tpu.dimension_semantics<parallel>, #tpu.dimension_semantics<parallel>, #tpu.dimension_semantics<arbitrary>], iteration_bounds = array<i64: 1, 1, 1>, scalar_prefetch = 0 : i64, scratch_operands = 1 : i64, tpu.core_type = #tpu.core_type<tc>, window_params = [{transform_indices = @transform_0, window_bounds = array<i64: 16, 128>}, {transform_indices = @transform_1, window_bounds = array<i64: 128, 128>}, {transform_indices = @transform_2, window_bounds = array<i64: 1, 128>}, {transform_indices = @transform_3, window_bounds = array<i64: 16, 128>}, {transform_indices = @transform_4, window_bounds = array<i64: 16, 128>}]} {
    %c0_i32 = arith.constant 0 : i32
    %0 = arith.cmpi eq, %arg2, %c0_i32 : i32
    %1 = arith.extui %0 : i1 to i32
    %c0_i32_0 = arith.constant 0 : i32
    %2 = arith.cmpi ne, %1, %c0_i32_0 : i32
    scf.if %2 {
      %cst_10 = arith.constant 0.000000e+00 : f32
      %12 = vector.broadcast %cst_10 : f32 to vector<16x128xf32>
      %c0_11 = arith.constant 0 : index
      %c0_12 = arith.constant 0 : index
      %13 = vector.load %arg8[%c0_11, %c0_12] : memref<16x128xf32, #tpu.memory_space<vmem>>, vector<16x128xf32>
      tpu.vector_store %arg8[%c0_11, %c0_12], %12 {strides = array<i32>} : memref<16x128xf32, #tpu.memory_space<vmem>>, vector<16x128xf32>,
    } else {
    }
    %c0 = arith.constant 0 : index
    %c0_1 = arith.constant 0 : index
    %3 = vector.load %arg8[%c0, %c0_1] : memref<16x128xf32, #tpu.memory_space<vmem>>, vector<16x128xf32>
    %c0_2 = arith.constant 0 : index
    %c0_3 = arith.constant 0 : index
    %4 = vector.load %arg3[%c0_2, %c0_3] : memref<16x128xbf16, #tpu.memory_space<vmem>>, vector<16x128xbf16>
    %c0_4 = arith.constant 0 : index
    %c0_5 = arith.constant 0 : index
    %5 = vector.load %arg4[%c0_4, %c0_5] : memref<128x128xbf16, #tpu.memory_space<vmem>>, vector<128x128xbf16>
    %cst = arith.constant dense<0.000000e+00> : vector<16x128xf32>
    %6 = tpu.matmul %4, %5, %cst {dimension_numbers = #tpu.dot_dimension_numbers<[1], [0], [0], [1], [0, 0, 1, 1], [], []>} : vector<16x128xbf16>, vector<128x128xbf16>, vector<16x128xf32> -> vector<16x128xf32>
    %7 = arith.addf %3, %6 : vector<16x128xf32>
    %c0_6 = arith.constant 0 : index
    %c0_7 = arith.constant 0 : index
    %8 = vector.load %arg8[%c0_6, %c0_7] : memref<16x128xf32, #tpu.memory_space<vmem>>, vector<16x128xf32>
    tpu.vector_store %arg8[%c0_6, %c0_7], %7 {strides = array<i32>} : memref<16x128xf32, #tpu.memory_space<vmem>>, vector<16x128xf32>,
    %c0_i32_8 = arith.constant 0 : i32
    %9 = arith.cmpi eq, %arg2, %c0_i32_8 : i32
    %10 = arith.extui %9 : i1 to i32
    %c0_i32_9 = arith.constant 0 : i32
    %11 = arith.cmpi ne, %10, %c0_i32_9 : i32
    scf.if %11 {
      %c0_10 = arith.constant 0 : index
      %c0_11 = arith.constant 0 : index
      %12 = vector.load %arg8[%c0_10, %c0_11] : memref<16x128xf32, #tpu.memory_space<vmem>>, vector<16x128xf32>
      %c0_12 = arith.constant 0 : index
      %c0_13 = arith.constant 0 : index
      %13 = vector.load %arg5[%c0_12, %c0_13] : memref<1x128xf32, #tpu.memory_space<vmem>>, vector<1x128xf32>
      %14 = vector.broadcast %13 : vector<1x128xf32> to vector<16x128xf32>
      %15 = arith.addf %12, %14 : vector<16x128xf32>
      %c0_14 = arith.constant 0 : index
      %c0_15 = arith.constant 0 : index
      %16 = vector.load %arg6[%c0_14, %c0_15] : memref<16x128xf32, #tpu.memory_space<vmem>>, vector<16x128xf32>
      %17 = arith.addf %15, %16 : vector<16x128xf32>
      %c0_16 = arith.constant 0 : index
      %c0_17 = arith.constant 0 : index
      %18 = vector.load %arg7[%c0_16, %c0_17] : memref<16x128xf32, #tpu.memory_space<vmem>>, vector<16x128xf32>
      tpu.vector_store %arg7[%c0_16, %c0_17], %17 {strides = array<i32>} : memref<16x128xf32, #tpu.memory_space<vmem>>, vector<16x128xf32>,
    } else {
    }
    return
  }
  func.func @transform_0(%arg0: i32, %arg1: i32, %arg2: i32) -> (i32, i32) {
    %c0_i32 = arith.constant 0 : i32
    return %arg0, %arg2 : i32, i32
  }
  func.func @transform_1(%arg0: i32, %arg1: i32, %arg2: i32) -> (i32, i32) {
    %c0_i32 = arith.constant 0 : i32
    return %arg2, %arg1 : i32, i32
  }
  func.func @transform_2(%arg0: i32, %arg1: i32, %arg2: i32) -> (i32, i32) {
    %c0_i32 = arith.constant 0 : i32
    %c0_i32_0 = arith.constant 0 : i32
    return %c0_i32, %arg1 : i32, i32
  }
  func.func @transform_3(%arg0: i32, %arg1: i32, %arg2: i32) -> (i32, i32) {
    %c0_i32 = arith.constant 0 : i32
    return %arg0, %arg1 : i32, i32
  }
  func.func @transform_4(%arg0: i32, %arg1: i32, %arg2: i32) -> (i32, i32) {
    %c0_i32 = arith.constant 0 : i32
    return %arg0, %arg1 : i32, i32
  }
}

</mosaic_0001>

<llo_original>
// kernel: tpu_custom_call.1
$region0: #{tpu_custom_call.1}
  #allocation0 [shape = 'u32[]', space=smem, size = 0x4, offset = 0x4, fixed_abs, tag = 'smem constant byte address 0x4 - core index']
  #allocation1 [shape = 'u32[72,128]{1,0:T(1,128)}', space=vmem, size = 0x9000, scoped, tag = 'internal scratch']
  #allocation2 [shape = 'f32[16,128]{1,0:T(8,128)}', space=vmem, size = 0x2000, scoped, tag = 'scratch operand']
  %s0 = inlined_call_operand.hbm [shape: bf16[16,128], index: 0, kind: input, shape index: {}]
  %s1 = inlined_call_operand.hbm [shape: bf16[128,128], index: 1, kind: input, shape index: {}]
  %s2 = inlined_call_operand.vmem [shape: f32[1,128], index: 2, kind: input, shape index: {}]
  %s3 = inlined_call_operand.hbm [shape: f32[16,128], index: 3, kind: input, shape index: {}]
  %s4 = inlined_call_operand.hbm [shape: f32[16,128], index: 4, kind: output, shape index: {}]
  %s5 = sld [smem:[#allocation0]]
  $region46: #{tpu_custom_call.1} parent=0
    _
  %s7 = ssub.s32 1, %s5
  %s8 = scalar_select 0, %s7, %s5
  $region1: #{tpu_custom_call.1} parent=0
    #allocation3 [shape = 'u8[4096]{0}', space=vmem, size = 0x1000, scoped, tag = 'input window, operand 0, single buffered']
    #allocation4 [shape = 's32[1]{0}', space=sflag, size = 0x4, scoped, tag = 'scoped memory for tpu_custom_call.1']
    #allocation5 [shape = 's32[1]{0}', space=sflag, size = 0x4, scoped, tag = 'scoped memory for tpu_custom_call.1']
    #allocation6 [shape = 'u8[32768]{0}', space=vmem, size = 0x8000, scoped, tag = 'input window, operand 1, single buffered']
    #allocation7 [shape = 's32[1]{0}', space=sflag, size = 0x4, scoped, tag = 'scoped memory for tpu_custom_call.1']
    #allocation8 [shape = 'u8[8192]{0}', space=vmem, size = 0x2000, scoped, tag = 'input window, operand 3, single buffered']
    #allocation9 [shape = 'u8[8192]{0}', space=vmem, size = 0x2000, scoped, tag = 'output window, operand 0, single buffered']
    %9 = vsyncpa [#allocation4], 0
    %10 = vsyncpa [#allocation7], 0
    %11 = vsyncpa [#allocation5], 0
    // Predicated region
    $region2: #{tpu_custom_call.1} parent=1 // pred_check
      _
    $region3: #{tpu_custom_call.1} parent=1 // pred_check_branch
      %13 = sbr.rel (0) target = $region5
    $region4: #{tpu_custom_call.1} parent=1 // pred_region
      %15 = vsyncadd [#allocation4], 0
      %s16 = sshll.u32 %s0, 4
      %s17 = int_to_ptr.hbm [resolvable:$true] %s16
      %s18 = sshll.u32 [#allocation3], 4
      %s19 = int_to_ptr.vmem [resolvable:$true] %s18
      %24 = dma.hbm_to_vmem [thread:$0]  %s17, 128, %s19, [#allocation4], 64, 64, 4
    $region5: #{tpu_custom_call.1} parent=1 // pred_fallthru
      _
    // Predicated region
    $region6: #{tpu_custom_call.1} parent=1 // pred_check
      _
    $region7: #{tpu_custom_call.1} parent=1 // pred_check_branch
      %26 = sbr.rel (0) target = $region9
    $region8: #{tpu_custom_call.1} parent=1 // pred_region
      %28 = vsyncadd [#allocation7], 0
      %s29 = sshll.u32 %s1, 4
      %s30 = int_to_ptr.hbm [resolvable:$true] %s29
      %s31 = sshll.u32 [#allocation6], 4
      %s32 = int_to_ptr.vmem [resolvable:$true] %s31
      %37 = dma.hbm_to_vmem [thread:$0]  %s30, 1024, %s32, [#allocation7], 64, 64, 4
    $region9: #{tpu_custom_call.1} parent=1 // pred_fallthru
      _
    // Predicated region
    $region10: #{tpu_custom_call.1} parent=1 // pred_check
      _
    $region11: #{tpu_custom_call.1} parent=1 // pred_check_branch
      %39 = sbr.rel (0) target = $region13
    $region12: #{tpu_custom_call.1} parent=1 // pred_region
      _
    $region13: #{tpu_custom_call.1} parent=1 // pred_fallthru
      _
    // Predicated region
    $region14: #{tpu_custom_call.1} parent=1 // pred_check
      _
    $region15: #{tpu_custom_call.1} parent=1 // pred_check_branch
      %41 = sbr.rel (0) target = $region17
    $region16: #{tpu_custom_call.1} parent=1 // pred_region
      %43 = vsyncadd [#allocation7], 0
      %s44 = sshll.u32 %s3, 4
      %s45 = int_to_ptr.hbm [resolvable:$true] %s44
      %s46 = sshll.u32 [#allocation8], 4
      %s47 = int_to_ptr.vmem [resolvable:$true] %s46
      %52 = dma.hbm_to_vmem [thread:$0]  %s45, 256, %s47, [#allocation7], 128, 128, 8
    $region17: #{tpu_custom_call.1} parent=1 // pred_fallthru
      _
    // Predicated region
    $region18: #{tpu_custom_call.1} parent=1 // pred_check
      _
    $region19: #{tpu_custom_call.1} parent=1 // pred_check_branch
      %54 = sbr.rel (0) target = $region21
    $region20: #{tpu_custom_call.1} parent=1 // pred_region
      %56 = dma.done [#allocation4], 128
    $region21: #{tpu_custom_call.1} parent=1 // pred_fallthru
      _
    // Predicated region
    $region22: #{tpu_custom_call.1} parent=1 // pred_check
      _
    $region23: #{tpu_custom_call.1} parent=1 // pred_check_branch
      %58 = sbr.rel (0) target = $region25
    $region24: #{tpu_custom_call.1} parent=1 // pred_region
      %60 = dma.done [#allocation7], 1024
    $region25: #{tpu_custom_call.1} parent=1 // pred_fallthru
      _
    // Predicated region
    $region26: #{tpu_custom_call.1} parent=1 // pred_check
      _
    $region27: #{tpu_custom_call.1} parent=1 // pred_check_branch
      %62 = sbr.rel (0) target = $region29
    $region28: #{tpu_custom_call.1} parent=1 // pred_region
      %64 = dma.done [#allocation7], 256
    $region29: #{tpu_custom_call.1} parent=1 // pred_fallthru
      _
    %p65 = scmp.eq.s32.totalorder 0, 0
    // Predicated region
    $region30: #{tpu_custom_call.1} parent=1 // pred_check
      %p66 = pneg %p65
    $region31: #{tpu_custom_call.1} parent=1 // pred_check_branch
      %68 = sbr.rel (%p66) target = $region33
    $region32: #{tpu_custom_call.1} parent=1 // pred_region
      %69 = vst [vmem:[#allocation2] sm:$0xff] 0.0
      %70 = vst [vmem:[#allocation2 + $0x8] sm:$0xff] 0.0
    $region33: #{tpu_custom_call.1} parent=1 // pred_fallthru
      _
    %v71 = vld [vmem:[#allocation2] sm:$0xff]
    %v72 = vld [vmem:[#allocation2 + $0x8] sm:$0xff]
    %v73 = vld [vmem:[#allocation3] sm:$0xf]
    %v74 = vld [vmem:[#allocation3 + $0x4] sm:$0xf]
    %v75 = vld [vmem:[#allocation6] sm:$0xf]
    %v76 = vld [vmem:[#allocation6 + $0x4] sm:$0xf]
    %v77 = vld [vmem:[#allocation6 + $0x8] sm:$0xf]
    %v78 = vld [vmem:[#allocation6 + $0xc] sm:$0xf]
    %v79 = vld [vmem:[#allocation6 + $0x10] sm:$0xf]
    %v80 = vld [vmem:[#allocation6 + $0x14] sm:$0xf]
    %v81 = vld [vmem:[#allocation6 + $0x18] sm:$0xf]
    %v82 = vld [vmem:[#allocation6 + $0x1c] sm:$0xf]
    %v83 = vld [vmem:[#allocation6 + $0x20] sm:$0xf]
    %v84 = vld [vmem:[#allocation6 + $0x24] sm:$0xf]
    %v85 = vld [vmem:[#allocation6 + $0x28] sm:$0xf]
    %v86 = vld [vmem:[#allocation6 + $0x2c] sm:$0xf]
    %v87 = vld [vmem:[#allocation6 + $0x30] sm:$0xf]
    %v88 = vld [vmem:[#allocation6 + $0x34] sm:$0xf]
    %v89 = vld [vmem:[#allocation6 + $0x38] sm:$0xf]
    %v90 = vld [vmem:[#allocation6 + $0x3c] sm:$0xf]
    %v93 = vunpack.c.l.b16 %v73
    %v94 = vunpack.c.l.b16 %v74
    %v95 = vpack.c.b16 %v94, %v93
    %v113 = vunpack.c.l.b16 %v75
    %v114 = vunpack.c.l.b16 %v76
    %v115 = vunpack.c.l.b16 %v77
    %v116 = vunpack.c.l.b16 %v78
    %v117 = vunpack.c.l.b16 %v79
    %v118 = vunpack.c.l.b16 %v80
    %v119 = vunpack.c.l.b16 %v81
    %v120 = vunpack.c.l.b16 %v82
    %v121 = vunpack.c.l.b16 %v83
    %v122 = vunpack.c.l.b16 %v84
    %v123 = vunpack.c.l.b16 %v85
    %v124 = vunpack.c.l.b16 %v86
    %v125 = vunpack.c.l.b16 %v87
    %v126 = vunpack.c.l.b16 %v88
    %v127 = vunpack.c.l.b16 %v89
    %v128 = vunpack.c.l.b16 %v90
    %v129 = vpack.c.b16 %v114, %v113
    %v130 = vpack.c.b16 %v116, %v115
    %v131 = vpack.c.b16 %v118, %v117
    %v132 = vpack.c.b16 %v120, %v119
    %v133 = vpack.c.b16 %v122, %v121
    %v134 = vpack.c.b16 %v124, %v123
    %v135 = vpack.c.b16 %v126, %v125
    %v136 = vpack.c.b16 %v128, %v127
    %145 = vmatpush.bf16.msra.mxu0 %v136
    %146 = vmatpush.bf16.msra.mxu0 %v135
    %147 = vmatpush.bf16.msra.mxu0 %v134
    %148 = vmatpush.bf16.msra.mxu0 %v133
    %149 = vmatpush.bf16.msra.mxu0 %v132
    %150 = vmatpush.bf16.msra.mxu0 %v131
    %151 = vmatpush.bf16.msra.mxu0 %v130
    %152 = vmatpush.bf16.msra.mxu0 %v129
    %153 = vmatmul.bf16.gmra.mxu0 %v95
    %v154 = vpop.f32.mrf.mxu0
    %v155 = vadd.f32 0.0, %v154
    %v156 = vpop.f32.mrf.mxu0
    %v157 = vadd.f32 0.0, %v156
    %158 = vdwg.mxu0
    %v159 = vadd.f32 %v71, %v155
    %v160 = vadd.f32 %v72, %v157
    %161 = vst [vmem:[#allocation2] sm:$0xff] %v159
    %162 = vst [vmem:[#allocation2 + $0x8] sm:$0xff] %v160
    // Predicated region
    $region34: #{tpu_custom_call.1} parent=1 // pred_check
      %p163 = pneg %p65
    $region35: #{tpu_custom_call.1} parent=1 // pred_check_branch
      %165 = sbr.rel (%p163) target = $region37
    $region36: #{tpu_custom_call.1} parent=1 // pred_region
      %v166 = vld [vmem:[#allocation2] sm:$0xff]
      %v167 = vld [vmem:[#allocation2 + $0x8] sm:$0xff]
      %v168 = vld [vmem:[%s2] sm:$0x1]
      %v170 = vperm.slane %v168, 0
      %v172 = vadd.f32 %v166, %v170
      %v173 = vadd.f32 %v167, %v170
      %v174 = vld [vmem:[#allocation8] sm:$0xff]
      %v175 = vld [vmem:[#allocation8 + $0x8] sm:$0xff]
      %v176 = vadd.f32 %v172, %v174
      %v177 = vadd.f32 %v173, %v175
      %178 = vst [vmem:[#allocation9] sm:$0xff] %v176
      %179 = vst [vmem:[#allocation9 + $0x8] sm:$0xff] %v177
    $region37: #{tpu_custom_call.1} parent=1 // pred_fallthru
      _
    // Predicated region
    $region38: #{tpu_custom_call.1} parent=1 // pred_check
      _
    $region39: #{tpu_custom_call.1} parent=1 // pred_check_branch
      %181 = sbr.rel (0) target = $region41
    $region40: #{tpu_custom_call.1} parent=1 // pred_region
      %183 = vsyncadd [#allocation5], 0
      %s184 = sshll.u32 [#allocation9], 4
      %s185 = int_to_ptr.vmem [resolvable:$true] %s184
      %s186 = sshll.u32 %s4, 4
      %s187 = int_to_ptr.hbm [resolvable:$true] %s186
      %192 = dma.vmem_to_hbm [thread:$0]  %s185, 256, %s187, [#allocation5], 128, 128, 8
    $region41: #{tpu_custom_call.1} parent=1 // pred_fallthru
      _
    // Predicated region
    $region42: #{tpu_custom_call.1} parent=1 // pred_check
      _
    $region43: #{tpu_custom_call.1} parent=1 // pred_check_branch
      %194 = sbr.rel (0) target = $region45
    $region44: #{tpu_custom_call.1} parent=1 // pred_region
      %196 = dma.done [#allocation5], 256
    $region45: #{tpu_custom_call.1} parent=1 // pred_fallthru
      _
    %197 = vsyncpa [#allocation4], 1
    %198 = vsyncpa [#allocation7], 1
    %199 = vsyncpa [#allocation5], 1

</llo_original>
